<compile_context>
chip_gen: v7x
topology: tpu7x:2x2x1
jax: 0.10.0
libtpu: 0.0.40
codegen_flags: <defaults>
</compile_context>

<pallas_src>
import functools

import jax
import jax.numpy as jnp
from jax.experimental import pallas as pl
from jax.experimental.pallas import tpu as pltpu


def _round_up(x, m):
    return (x + m - 1) // m * m


def _convT_bn_glu_kernel(x_ref, w_ref, shift_ref, o_ref, xcat_ref, *,
                         K, Wp, Cin_p, Lout):
    # x_ref:     (1, Cin_p, Lin)     zero-padded input, flattened padded spatial
    # w_ref:     (Cout_p, K*K*Cin_p) flipped, BN-scale-folded weights
    # shift_ref: (Cout_p, 1)         folded conv-bias + BN shift
    # o_ref:     (1, Cout_p, Lout)
    # xcat_ref:  (K*K*Cin_p, Lout)   VMEM im2col scratch
    for t in range(K * K):                       # 16 static, unrolled taps
        kh, kw = divmod(t, K)
        off = kh * Wp + kw                       # static lane offset of tap t
        xcat_ref[pl.ds(t * Cin_p, Cin_p), :] = (
            x_ref[0, :, pl.ds(off, Lout)].astype(xcat_ref.dtype))
    # Single MXU matmul over the full (taps x channels) contraction dim.
    y = jnp.dot(w_ref[...], xcat_ref[...],
                preferred_element_type=jnp.float32)          # (Cout_p, Lout) f32
    y = y + shift_ref[...]                                   # folded BN + bias
    sig = 1.0 / (1.0 + jnp.exp(-y))                          # GLU(cat([y,y])) == y*sigmoid(y)
    o_ref[0] = (y * sig).astype(o_ref.dtype)


def conv_transpose_forward(x, w, b, gamma, beta, running_mean, running_var,
                           eps=1e-5, compute_dtype=jnp.float32):
    """ConvTranspose2d(k=4, s=1, p=0) -> BatchNorm2d(eval) -> GLU.

    x: (N, Cin, H, W) NCHW; w: (Cin, Cout, 4, 4) (PyTorch ConvTranspose2d layout).
    compute_dtype: matmul input dtype (jnp.bfloat16 halves HBM traffic on
    v5e/v6e; accumulation and the epilogue always stay in f32).
    """
    N, Cin, H, W = x.shape
    K = w.shape[2]
    Cout = w.shape[1]
    Ho, Wo = H + K - 1, W + K - 1                 # stride=1, padding=0 output size
    Hp, Wp = H + 2 * (K - 1), W + 2 * (K - 1)     # (K-1)-zero-padded input plane

    Cin_p = _round_up(Cin, 8)                     # sublane alignment
    Cout_p = _round_up(Cout, 8)

    # ---- fold BatchNorm (eval: running stats) + conv bias -------------------
    # TODO(synk): training-mode BatchNorm (batch statistics) is not supported.
    scale = (gamma.astype(jnp.float32) /
             jnp.sqrt(running_var.astype(jnp.float32) + eps))            # (Cout,)
    shift = ((b.astype(jnp.float32) - running_mean.astype(jnp.float32)) * scale
             + beta.astype(jnp.float32))                                  # (Cout,)

    # Flipped + BN-scaled weight, laid out to match the in-kernel im2col:
    #   wmat[co, t*Cin_p + ci] = w[ci, co, K-1-kh, K-1-kw] * scale[co], t = kh*K+kw
    wf = jnp.flip(w.astype(jnp.float32), axis=(2, 3))         # (Cin, Cout, K, K)
    wf = jnp.transpose(wf, (2, 3, 1, 0)).reshape(K * K, Cout, Cin)
    wf = wf * scale[None, :, None]
    wf = jnp.pad(wf, ((0, 0), (0, Cout_p - Cout), (0, Cin_p - Cin)))
    wmat = jnp.transpose(wf, (1, 0, 2)).reshape(Cout_p, K * K * Cin_p)
    wmat = wmat.astype(compute_dtype)
    shift_p = jnp.pad(shift, (0, Cout_p - Cout)).reshape(Cout_p, 1)

    # ---- flatten padded NCHW spatial onto the lane axis (no NHWC transpose) --
    Lout = _round_up(Ho * Wp, 128)                        # lane-dense output
    Lin = _round_up(Lout + (K - 1) * Wp + (K - 1), 128)   # covers max tap offset
    xp = jnp.pad(x, ((0, 0), (0, Cin_p - Cin),
                     (K - 1, K - 1), (K - 1, K - 1))).reshape(N, Cin_p, Hp * Wp)
    xflat = jnp.pad(xp, ((0, 0), (0, 0), (0, Lin - Hp * Wp))).astype(compute_dtype)

    kernel = functools.partial(_convT_bn_glu_kernel,
                               K=K, Wp=Wp, Cin_p=Cin_p, Lout=Lout)

    dsize = jnp.dtype(compute_dtype).itemsize
    vmem_need = (2 * Cin_p * Lin * dsize                     # double-buffered input
                 + 2 * Cout_p * Lout * x.dtype.itemsize      # double-buffered output
                 + Cout_p * K * K * Cin_p * dsize            # resident weights
                 + Cout_p * 4                                # shift
                 + K * K * Cin_p * Lout * dsize)             # im2col scratch
    # Generous headroom; stays well below v7x's 64 MiB physical VMEM per core.
    vmem_limit = int(min(max(2 * vmem_need, 16 * 1024 * 1024), 48 * 1024 * 1024))

    cost = pl.CostEstimate(
        flops=2 * N * Cout * Cin * K * K * Ho * Wo,
        transcendentals=N * Cout * Ho * Wo,
        bytes_accessed=(x.size + N * Cout * Ho * Wo) * x.dtype.itemsize
                        + wmat.size * dsize)

    out_flat = pl.pallas_call(
        kernel,
        out_shape=jax.ShapeDtypeStruct((N, Cout_p, Lout), x.dtype),
        grid_spec=pltpu.PrefetchScalarGridSpec(
            num_scalar_prefetch=0,
            grid=(N,),
            in_specs=[
                pl.BlockSpec((1, Cin_p, Lin), lambda n: (n, 0, 0)),        # x
                pl.BlockSpec((Cout_p, K * K * Cin_p), lambda n: (0, 0)),   # weights
                pl.BlockSpec((Cout_p, 1), lambda n: (0, 0)),               # shift
            ],
            out_specs=pl.BlockSpec((1, Cout_p, Lout), lambda n: (n, 0, 0)),
            scratch_shapes=[pltpu.VMEM((K * K * Cin_p, Lout), compute_dtype)],
        ),
        compiler_params=pltpu.CompilerParams(
            dimension_semantics=("parallel",),
            vmem_limit_bytes=vmem_limit),
        cost_estimate=cost,
    )(xflat, wmat, shift_p)

    # (N, Cout_p, Lout) -> NCHW (N, Cout, Ho, Wo): drop channel/lane padding.
    out = out_flat[:, :Cout, :Ho * Wp].reshape(N, Cout, Ho, Wp)[:, :, :, :Wo]
    return out


def _reference(x, w, b, gamma, beta, mean, var, eps=1e-5):
    """Direct (scatter-form) ConvTranspose2d + BN(eval) + GLU reference."""
    N, Cin, H, W = x.shape
    Cout, K = w.shape[1], w.shape[2]
    Ho, Wo = H + K - 1, W + K - 1
    y = jnp.zeros((N, Cout, Ho, Wo), jnp.float32)
    for kh in range(K):
        for kw in range(K):
            contrib = jnp.einsum('ncij,co->noij', x, w[:, :, kh, kw])
            y = y.at[:, :, kh:kh + H, kw:kw + W].add(contrib)
    y = y + b[None, :, None, None]
    y = (y - mean[None, :, None, None]) / jnp.sqrt(var[None, :, None, None] + eps)
    y = y * gamma[None, :, None, None] + beta[None, :, None, None]
    # GLU(cat([y, y], dim=-1)) == y * sigmoid(y)
    return y * (1.0 / (1.0 + jnp.exp(-y)))


if __name__ == "__main__":
    # Small shapes consistent with the module: batch=2, ch_in=4, ch_out=8, 16x16.
    N, Cin, Cout, H, W = 2, 4, 8, 16, 16
    K = 4

    key = jax.random.PRNGKey(0)
    kx, kw, kb, kg, kbe, km, kv = jax.random.split(key, 7)

    x = jax.random.normal(kx, (N, Cin, H, W), dtype=jnp.float32)
    # PyTorch ConvTranspose2d weight layout: (in_channels, out_channels, kH, kW)
    w = jax.random.normal(kw, (Cin, Cout, K, K), dtype=jnp.float32) * 0.1
    b = jax.random.normal(kb, (Cout,), dtype=jnp.float32) * 0.1
    gamma = 1.0 + 0.1 * jax.random.normal(kg, (Cout,), dtype=jnp.float32)
    beta = 0.1 * jax.random.normal(kbe, (Cout,), dtype=jnp.float32)
    running_mean = 0.1 * jax.random.normal(km, (Cout,), dtype=jnp.float32)
    running_var = jnp.abs(jax.random.normal(kv, (Cout,), dtype=jnp.float32)) + 0.5

    out = conv_transpose_forward(x, w, b, gamma, beta, running_mean, running_var)
    out = jax.block_until_ready(out)

    ref = _reference(x, w, b, gamma, beta, running_mean, running_var)
    assert out.shape == (N, Cout, H + K - 1, W + K - 1), out.shape
    max_err = float(jnp.max(jnp.abs(out - ref)))
    assert jnp.allclose(out, ref, atol=5e-3, rtol=5e-3), (
        f"mismatch vs reference, max abs err {max_err}")

    print("KERNEL_OK")
</pallas_src>

<mosaic_0001>
module attributes {stable_mosaic.version = 11 : i64} {
  func.func @_convT_bn_glu_kernel(%arg0: i32, %arg1: memref<1x8x640xf32, #tpu.memory_space<vmem>>, %arg2: memref<8x128xf32, #tpu.memory_space<vmem>>, %arg3: memref<8x1xf32, #tpu.memory_space<vmem>>, %arg4: memref<1x8x512xf32, #tpu.memory_space<vmem>>, %arg5: memref<128x512xf32, #tpu.memory_space<vmem>>) attributes {dimension_semantics = [#tpu.dimension_semantics<parallel>], iteration_bounds = array<i64: 2>, scalar_prefetch = 0 : i64, scratch_operands = 1 : i64, tpu.core_type = #tpu.core_type<tc>, window_params = [{transform_indices = @transform_0, window_bounds = array<i64: 1, 8, 640>}, {pipeline_mode = #tpu.pipeline_mode<synchronous>, transform_indices = @transform_1, window_bounds = array<i64: 8, 128>}, {pipeline_mode = #tpu.pipeline_mode<synchronous>, transform_indices = @transform_2, window_bounds = array<i64: 8, 1>}, {transform_indices = @transform_3, window_bounds = array<i64: 1, 8, 512>}]} {
    %c0 = arith.constant 0 : index
    %c0_0 = arith.constant 0 : index
    %c0_1 = arith.constant 0 : index
    %0 = vector.load %arg1[%c0, %c0_0, %c0_1] : memref<1x8x640xf32, #tpu.memory_space<vmem>>, vector<1x8x512xf32>
    %1 = vector.shape_cast %0 : vector<1x8x512xf32> to vector<8x512xf32>
    %c0_2 = arith.constant 0 : index
    %c0_3 = arith.constant 0 : index
    %2 = vector.load %arg5[%c0_2, %c0_3] : memref<128x512xf32, #tpu.memory_space<vmem>>, vector<8x512xf32>
    tpu.vector_store %arg5[%c0_2, %c0_3], %1 {strides = array<i32>} : memref<128x512xf32, #tpu.memory_space<vmem>>, vector<8x512xf32>,
    %c0_4 = arith.constant 0 : index
    %c0_5 = arith.constant 0 : index
    %c1 = arith.constant 1 : index
    %3 = vector.load %arg1[%c0_4, %c0_5, %c1] : memref<1x8x640xf32, #tpu.memory_space<vmem>>, vector<1x8x512xf32>
    %4 = vector.shape_cast %3 : vector<1x8x512xf32> to vector<8x512xf32>
    %c8 = arith.constant 8 : index
    %c0_6 = arith.constant 0 : index
    %5 = vector.load %arg5[%c8, %c0_6] : memref<128x512xf32, #tpu.memory_space<vmem>>, vector<8x512xf32>
    tpu.vector_store %arg5[%c8, %c0_6], %4 {strides = array<i32>} : memref<128x512xf32, #tpu.memory_space<vmem>>, vector<8x512xf32>,
    %c0_7 = arith.constant 0 : index
    %c0_8 = arith.constant 0 : index
    %c2 = arith.constant 2 : index
    %6 = vector.load %arg1[%c0_7, %c0_8, %c2] : memref<1x8x640xf32, #tpu.memory_space<vmem>>, vector<1x8x512xf32>
    %7 = vector.shape_cast %6 : vector<1x8x512xf32> to vector<8x512xf32>
    %c16 = arith.constant 16 : index
    %c0_9 = arith.constant 0 : index
    %8 = vector.load %arg5[%c16, %c0_9] : memref<128x512xf32, #tpu.memory_space<vmem>>, vector<8x512xf32>
    tpu.vector_store %arg5[%c16, %c0_9], %7 {strides = array<i32>} : memref<128x512xf32, #tpu.memory_space<vmem>>, vector<8x512xf32>,
    %c0_10 = arith.constant 0 : index
    %c0_11 = arith.constant 0 : index
    %c3 = arith.constant 3 : index
    %9 = vector.load %arg1[%c0_10, %c0_11, %c3] : memref<1x8x640xf32, #tpu.memory_space<vmem>>, vector<1x8x512xf32>
    %10 = vector.shape_cast %9 : vector<1x8x512xf32> to vector<8x512xf32>
    %c24 = arith.constant 24 : index
    %c0_12 = arith.constant 0 : index
    %11 = vector.load %arg5[%c24, %c0_12] : memref<128x512xf32, #tpu.memory_space<vmem>>, vector<8x512xf32>
    tpu.vector_store %arg5[%c24, %c0_12], %10 {strides = array<i32>} : memref<128x512xf32, #tpu.memory_space<vmem>>, vector<8x512xf32>,
    %c0_13 = arith.constant 0 : index
    %c0_14 = arith.constant 0 : index
    %c22 = arith.constant 22 : index
    %12 = vector.load %arg1[%c0_13, %c0_14, %c22] : memref<1x8x640xf32, #tpu.memory_space<vmem>>, vector<1x8x512xf32>
    %13 = vector.shape_cast %12 : vector<1x8x512xf32> to vector<8x512xf32>
    %c32 = arith.constant 32 : index
    %c0_15 = arith.constant 0 : index
    %14 = vector.load %arg5[%c32, %c0_15] : memref<128x512xf32, #tpu.memory_space<vmem>>, vector<8x512xf32>
    tpu.vector_store %arg5[%c32, %c0_15], %13 {strides = array<i32>} : memref<128x512xf32, #tpu.memory_space<vmem>>, vector<8x512xf32>,
    %c0_16 = arith.constant 0 : index
    %c0_17 = arith.constant 0 : index
    %c23 = arith.constant 23 : index
    %15 = vector.load %arg1[%c0_16, %c0_17, %c23] : memref<1x8x640xf32, #tpu.memory_space<vmem>>, vector<1x8x512xf32>
    %16 = vector.shape_cast %15 : vector<1x8x512xf32> to vector<8x512xf32>
    %c40 = arith.constant 40 : index
    %c0_18 = arith.constant 0 : index
    %17 = vector.load %arg5[%c40, %c0_18] : memref<128x512xf32, #tpu.memory_space<vmem>>, vector<8x512xf32>
    tpu.vector_store %arg5[%c40, %c0_18], %16 {strides = array<i32>} : memref<128x512xf32, #tpu.memory_space<vmem>>, vector<8x512xf32>,
    %c0_19 = arith.constant 0 : index
    %c0_20 = arith.constant 0 : index
    %c24_21 = arith.constant 24 : index
    %18 = vector.load %arg1[%c0_19, %c0_20, %c24_21] : memref<1x8x640xf32, #tpu.memory_space<vmem>>, vector<1x8x512xf32>
    %19 = vector.shape_cast %18 : vector<1x8x512xf32> to vector<8x512xf32>
    %c48 = arith.constant 48 : index
    %c0_22 = arith.constant 0 : index
    %20 = vector.load %arg5[%c48, %c0_22] : memref<128x512xf32, #tpu.memory_space<vmem>>, vector<8x512xf32>
    tpu.vector_store %arg5[%c48, %c0_22], %19 {strides = array<i32>} : memref<128x512xf32, #tpu.memory_space<vmem>>, vector<8x512xf32>,
    %c0_23 = arith.constant 0 : index
    %c0_24 = arith.constant 0 : index
    %c25 = arith.constant 25 : index
    %21 = vector.load %arg1[%c0_23, %c0_24, %c25] : memref<1x8x640xf32, #tpu.memory_space<vmem>>, vector<1x8x512xf32>
    %22 = vector.shape_cast %21 : vector<1x8x512xf32> to vector<8x512xf32>
    %c56 = arith.constant 56 : index
    %c0_25 = arith.constant 0 : index
    %23 = vector.load %arg5[%c56, %c0_25] : memref<128x512xf32, #tpu.memory_space<vmem>>, vector<8x512xf32>
    tpu.vector_store %arg5[%c56, %c0_25], %22 {strides = array<i32>} : memref<128x512xf32, #tpu.memory_space<vmem>>, vector<8x512xf32>,
    %c0_26 = arith.constant 0 : index
    %c0_27 = arith.constant 0 : index
    %c44 = arith.constant 44 : index
    %24 = vector.load %arg1[%c0_26, %c0_27, %c44] : memref<1x8x640xf32, #tpu.memory_space<vmem>>, vector<1x8x512xf32>
    %25 = vector.shape_cast %24 : vector<1x8x512xf32> to vector<8x512xf32>
    %c64 = arith.constant 64 : index
    %c0_28 = arith.constant 0 : index
    %26 = vector.load %arg5[%c64, %c0_28] : memref<128x512xf32, #tpu.memory_space<vmem>>, vector<8x512xf32>
    tpu.vector_store %arg5[%c64, %c0_28], %25 {strides = array<i32>} : memref<128x512xf32, #tpu.memory_space<vmem>>, vector<8x512xf32>,
    %c0_29 = arith.constant 0 : index
    %c0_30 = arith.constant 0 : index
    %c45 = arith.constant 45 : index
    %27 = vector.load %arg1[%c0_29, %c0_30, %c45] : memref<1x8x640xf32, #tpu.memory_space<vmem>>, vector<1x8x512xf32>
    %28 = vector.shape_cast %27 : vector<1x8x512xf32> to vector<8x512xf32>
    %c72 = arith.constant 72 : index
    %c0_31 = arith.constant 0 : index
    %29 = vector.load %arg5[%c72, %c0_31] : memref<128x512xf32, #tpu.memory_space<vmem>>, vector<8x512xf32>
    tpu.vector_store %arg5[%c72, %c0_31], %28 {strides = array<i32>} : memref<128x512xf32, #tpu.memory_space<vmem>>, vector<8x512xf32>,
    %c0_32 = arith.constant 0 : index
    %c0_33 = arith.constant 0 : index
    %c46 = arith.constant 46 : index
    %30 = vector.load %arg1[%c0_32, %c0_33, %c46] : memref<1x8x640xf32, #tpu.memory_space<vmem>>, vector<1x8x512xf32>
    %31 = vector.shape_cast %30 : vector<1x8x512xf32> to vector<8x512xf32>
    %c80 = arith.constant 80 : index
    %c0_34 = arith.constant 0 : index
    %32 = vector.load %arg5[%c80, %c0_34] : memref<128x512xf32, #tpu.memory_space<vmem>>, vector<8x512xf32>
    tpu.vector_store %arg5[%c80, %c0_34], %31 {strides = array<i32>} : memref<128x512xf32, #tpu.memory_space<vmem>>, vector<8x512xf32>,
    %c0_35 = arith.constant 0 : index
    %c0_36 = arith.constant 0 : index
    %c47 = arith.constant 47 : index
    %33 = vector.load %arg1[%c0_35, %c0_36, %c47] : memref<1x8x640xf32, #tpu.memory_space<vmem>>, vector<1x8x512xf32>
    %34 = vector.shape_cast %33 : vector<1x8x512xf32> to vector<8x512xf32>
    %c88 = arith.constant 88 : index
    %c0_37 = arith.constant 0 : index
    %35 = vector.load %arg5[%c88, %c0_37] : memref<128x512xf32, #tpu.memory_space<vmem>>, vector<8x512xf32>
    tpu.vector_store %arg5[%c88, %c0_37], %34 {strides = array<i32>} : memref<128x512xf32, #tpu.memory_space<vmem>>, vector<8x512xf32>,
    %c0_38 = arith.constant 0 : index
    %c0_39 = arith.constant 0 : index
    %c66 = arith.constant 66 : index
    %36 = vector.load %arg1[%c0_38, %c0_39, %c66] : memref<1x8x640xf32, #tpu.memory_space<vmem>>, vector<1x8x512xf32>
    %37 = vector.shape_cast %36 : vector<1x8x512xf32> to vector<8x512xf32>
    %c96 = arith.constant 96 : index
    %c0_40 = arith.constant 0 : index
    %38 = vector.load %arg5[%c96, %c0_40] : memref<128x512xf32, #tpu.memory_space<vmem>>, vector<8x512xf32>
    tpu.vector_store %arg5[%c96, %c0_40], %37 {strides = array<i32>} : memref<128x512xf32, #tpu.memory_space<vmem>>, vector<8x512xf32>,
    %c0_41 = arith.constant 0 : index
    %c0_42 = arith.constant 0 : index
    %c67 = arith.constant 67 : index
    %39 = vector.load %arg1[%c0_41, %c0_42, %c67] : memref<1x8x640xf32, #tpu.memory_space<vmem>>, vector<1x8x512xf32>
    %40 = vector.shape_cast %39 : vector<1x8x512xf32> to vector<8x512xf32>
    %c104 = arith.constant 104 : index
    %c0_43 = arith.constant 0 : index
    %41 = vector.load %arg5[%c104, %c0_43] : memref<128x512xf32, #tpu.memory_space<vmem>>, vector<8x512xf32>
    tpu.vector_store %arg5[%c104, %c0_43], %40 {strides = array<i32>} : memref<128x512xf32, #tpu.memory_space<vmem>>, vector<8x512xf32>,
    %c0_44 = arith.constant 0 : index
    %c0_45 = arith.constant 0 : index
    %c68 = arith.constant 68 : index
    %42 = vector.load %arg1[%c0_44, %c0_45, %c68] : memref<1x8x640xf32, #tpu.memory_space<vmem>>, vector<1x8x512xf32>
    %43 = vector.shape_cast %42 : vector<1x8x512xf32> to vector<8x512xf32>
    %c112 = arith.constant 112 : index
    %c0_46 = arith.constant 0 : index
    %44 = vector.load %arg5[%c112, %c0_46] : memref<128x512xf32, #tpu.memory_space<vmem>>, vector<8x512xf32>
    tpu.vector_store %arg5[%c112, %c0_46], %43 {strides = array<i32>} : memref<128x512xf32, #tpu.memory_space<vmem>>, vector<8x512xf32>,
    %c0_47 = arith.constant 0 : index
    %c0_48 = arith.constant 0 : index
    %c69 = arith.constant 69 : index
    %45 = vector.load %arg1[%c0_47, %c0_48, %c69] : memref<1x8x640xf32, #tpu.memory_space<vmem>>, vector<1x8x512xf32>
    %46 = vector.shape_cast %45 : vector<1x8x512xf32> to vector<8x512xf32>
    %c120 = arith.constant 120 : index
    %c0_49 = arith.constant 0 : index
    %47 = vector.load %arg5[%c120, %c0_49] : memref<128x512xf32, #tpu.memory_space<vmem>>, vector<8x512xf32>
    tpu.vector_store %arg5[%c120, %c0_49], %46 {strides = array<i32>} : memref<128x512xf32, #tpu.memory_space<vmem>>, vector<8x512xf32>,
    %c0_50 = arith.constant 0 : index
    %c0_51 = arith.constant 0 : index
    %48 = vector.load %arg2[%c0_50, %c0_51] : memref<8x128xf32, #tpu.memory_space<vmem>>, vector<8x128xf32>
    %c0_52 = arith.constant 0 : index
    %c0_53 = arith.constant 0 : index
    %49 = vector.load %arg5[%c0_52, %c0_53] : memref<128x512xf32, #tpu.memory_space<vmem>>, vector<128x512xf32>
    %cst = arith.constant dense<0.000000e+00> : vector<8x512xf32>
    %50 = tpu.matmul %48, %49, %cst {dimension_numbers = #tpu.dot_dimension_numbers<[1], [0], [0], [1], [0, 0, 1, 1], [], []>} : vector<8x128xf32>, vector<128x512xf32>, vector<8x512xf32> -> vector<8x512xf32>
    %c0_54 = arith.constant 0 : index
    %c0_55 = arith.constant 0 : index
    %51 = vector.load %arg3[%c0_54, %c0_55] : memref<8x1xf32, #tpu.memory_space<vmem>>, vector<8x1xf32>
    %52 = vector.broadcast %51 : vector<8x1xf32> to vector<8x512xf32>
    %53 = arith.addf %50, %52 : vector<8x512xf32>
    %cst_56 = arith.constant 0.000000e+00 : f32
    %54 = vector.broadcast %cst_56 : f32 to vector<8x512xf32>
    %55 = arith.subf %54, %53 : vector<8x512xf32>
    %56 = math.exp %55 : vector<8x512xf32>
    %cst_57 = arith.constant 1.000000e+00 : f32
    %57 = vector.broadcast %cst_57 : f32 to vector<8x512xf32>
    %58 = arith.addf %57, %56 : vector<8x512xf32>
    %cst_58 = arith.constant 1.000000e+00 : f32
    %59 = vector.broadcast %cst_58 : f32 to vector<8x512xf32>
    %60 = arith.divf %59, %58 : vector<8x512xf32>
    %61 = arith.mulf %53, %60 : vector<8x512xf32>
    %c0_59 = arith.constant 0 : index
    %c0_60 = arith.constant 0 : index
    %c0_61 = arith.constant 0 : index
    %62 = vector.load %arg4[%c0_59, %c0_60, %c0_61] : memref<1x8x512xf32, #tpu.memory_space<vmem>>, vector<1x8x512xf32>
    %63 = vector.shape_cast %62 : vector<1x8x512xf32> to vector<8x512xf32>
    %64 = vector.shape_cast %61 : vector<8x512xf32> to vector<1x8x512xf32>
    tpu.vector_store %arg4[%c0_59, %c0_60, %c0_61], %64 {strides = array<i32>} : memref<1x8x512xf32, #tpu.memory_space<vmem>>, vector<1x8x512xf32>,
    return
  }
  func.func @transform_0(%arg0: i32) -> (i32, i32, i32) {
    %c0_i32 = arith.constant 0 : i32
    %c0_i32_0 = arith.constant 0 : i32
    %c0_i32_1 = arith.constant 0 : i32
    return %arg0, %c0_i32, %c0_i32_0 : i32, i32, i32
  }
  func.func @transform_1(%arg0: i32) -> (i32, i32) {
    %c0_i32 = arith.constant 0 : i32
    %c0_i32_0 = arith.constant 0 : i32
    %c0_i32_1 = arith.constant 0 : i32
    return %c0_i32, %c0_i32_0 : i32, i32
  }
  func.func @transform_2(%arg0: i32) -> (i32, i32) {
    %c0_i32 = arith.constant 0 : i32
    %c0_i32_0 = arith.constant 0 : i32
    %c0_i32_1 = arith.constant 0 : i32
    return %c0_i32, %c0_i32_0 : i32, i32
  }
  func.func @transform_3(%arg0: i32) -> (i32, i32, i32) {
    %c0_i32 = arith.constant 0 : i32
    %c0_i32_0 = arith.constant 0 : i32
    %c0_i32_1 = arith.constant 0 : i32
    return %arg0, %c0_i32, %c0_i32_0 : i32, i32, i32
  }
}

</mosaic_0001>

<llo_original>
// kernel: tpu_custom_call.1
$region0: #{tpu_custom_call.1}
  #allocation0 [shape = 'u32[]', space=smem, size = 0x4, offset = 0x4, fixed_abs, tag = 'smem constant byte address 0x4 - core index']
  #allocation1 [shape = 'u32[144,128]{1,0:T(1,128)}', space=vmem, size = 0x12000, scoped, tag = 'internal scratch']
  #allocation2 [shape = 'f32[128,512]{1,0:T(8,128)}', space=vmem, size = 0x40000, scoped, tag = 'scratch operand']
  %s0 = inlined_call_operand.hbm [shape: f32[2,8,640], index: 0, kind: input, shape index: {}]
  %s1 = inlined_call_operand.vmem [shape: f32[8,128], index: 1, kind: input, shape index: {}]
  %s2 = inlined_call_operand.vmem [shape: f32[8,1], index: 2, kind: input, shape index: {}]
  %s3 = inlined_call_operand.hbm [shape: f32[2,8,512], index: 3, kind: output, shape index: {}]
  %s4 = sld [smem:[#allocation0]]
  $region49: #{tpu_custom_call.1} parent=0
    _
  %s6 = ssub.s32 1, %s4
  %s7 = scalar_select 0, %s6, %s4
  $region1: #{tpu_custom_call.1} parent=0
    #allocation3 [shape = 'u8[40960]{0}', space=vmem, size = 0xa000, scoped, tag = 'input window, operand 0']
    #allocation4 [shape = 's32[2]{0}', space=sflag, size = 0x8, scoped, tag = 'scoped memory for tpu_custom_call.1']
    #allocation5 [shape = 's32[2]{0}', space=sflag, size = 0x8, scoped, tag = 'scoped memory for tpu_custom_call.1']
    #allocation6 [shape = 'u8[32768]{0}', space=vmem, size = 0x8000, scoped, tag = 'output window, operand 0']
    %8 = vsyncpa [#allocation4], 0
    %s9 = scalar_lea.sflag [#allocation4], 1
    %10 = vsyncpa %s9, 0
    %11 = vsyncpa [#allocation5], 0
    %s12 = scalar_lea.sflag [#allocation5], 1
    %13 = vsyncpa %s12, 0
    loop: start=0, step=1, limit=4
    $region2: #{tpu_custom_call.1} parent=1 // loop_pre_header
      _
    $region3: #{tpu_custom_call.1} parent=1 // loop_header
      %s15 = sphi 0, %s19
      %p16 = scmp.ge.s32.totalorder %s15, 4
      %s25 = sphi 0, %s27
      %s28 = sphi 0, %s25
      %s29 = sphi 0, %s28
      %s45 = sphi 0, %s29
      %s49 = sphi 0, %s49
      %s51 = sphi 0, %s49
      %s52 = sphi 0, %s51
      %s66 = sphi 0, %s52
      %s70 = sphi 0, %s70
      %s72 = sphi 0, %s70
      %s73 = sphi 0, %s72
      %s87 = sphi 0, %s73
      %s93 = sphi 0, %s95
      %s96 = sphi 0, %s93
      %s97 = sphi 0, %s96
      %s113 = sphi 0, %s97
    $region4: #{tpu_custom_call.1} parent=1 // loop_header_branch
      %18 = sbr.rel (%p16) target = $region8
    $region5: #{tpu_custom_call.1} parent=1 // loop_body
      %s20 = ssub.s32 %s15, 1
      %s21 = ssub.s32 %s15, 2
      %s22 = sadd.s32 %s15, 1
      %s23 = ssub.s32 %s15, %s22
      %p24 = scmp.eq.s32.totalorder %s23, 0
      %s26 = sadd.s32 %s25, 1
      %s27 = scalar_select %p24, %s25, %s26
      %p30 = pneg %p24
      %p31 = scmp.eq.s32.totalorder %s15, 1
      %p32 = por %p30, %p31
      %p33 = scmp.ne.s32.totalorder %s25, %s28
      %p34 = scmp.eq.s32.totalorder %s15, 0
      %p35 = por %p33, %p34
      %p36 = scmp.ne.s32.totalorder %s25, %s28
      %p37 = scmp.eq.s32.totalorder %s20, 1
      %p38 = por %p36, %p37
      %p39 = scmp.ne.s32.totalorder %s28, %s29
      %p40 = scmp.eq.s32.totalorder %s20, 0
      %p41 = por %p39, %p40
      %p42 = scmp.ne.s32.totalorder %s28, %s29
      %p43 = scmp.eq.s32.totalorder %s21, 1
      %p44 = por %p42, %p43
      %p46 = scmp.ne.s32.totalorder %s29, %s45
      %p47 = scmp.eq.s32.totalorder %s21, 0
      %p48 = por %p46, %p47
      %s50 = sadd.s32 %s49, 1
      %p53 = scmp.eq.s32.totalorder %s15, 1
      %p54 = scmp.ne.s32.totalorder %s49, %s51
      %p55 = scmp.eq.s32.totalorder %s15, 0
      %p56 = por %p54, %p55
      %p57 = scmp.ne.s32.totalorder %s49, %s51
      %p58 = scmp.eq.s32.totalorder %s20, 1
      %p59 = por %p57, %p58
      %p60 = scmp.ne.s32.totalorder %s51, %s52
      %p61 = scmp.eq.s32.totalorder %s20, 0
      %p62 = por %p60, %p61
      %p63 = scmp.ne.s32.totalorder %s51, %s52
      %p64 = scmp.eq.s32.totalorder %s21, 1
      %p65 = por %p63, %p64
      %p67 = scmp.ne.s32.totalorder %s52, %s66
      %p68 = scmp.eq.s32.totalorder %s21, 0
      %p69 = por %p67, %p68
      %s71 = sadd.s32 %s70, 1
      %p74 = scmp.eq.s32.totalorder %s15, 1
      %p75 = scmp.ne.s32.totalorder %s70, %s72
      %p76 = scmp.eq.s32.totalorder %s15, 0
      %p77 = por %p75, %p76
      %p78 = scmp.ne.s32.totalorder %s70, %s72
      %p79 = scmp.eq.s32.totalorder %s20, 1
      %p80 = por %p78, %p79
      %p81 = scmp.ne.s32.totalorder %s72, %s73
      %p82 = scmp.eq.s32.totalorder %s20, 0
      %p83 = por %p81, %p82
      %p84 = scmp.ne.s32.totalorder %s72, %s73
      %p85 = scmp.eq.s32.totalorder %s21, 1
      %p86 = por %p84, %p85
      %p88 = scmp.ne.s32.totalorder %s73, %s87
      %p89 = scmp.eq.s32.totalorder %s21, 0
      %p90 = por %p88, %p89
      %s91 = ssub.s32 %s15, %s22
      %p92 = scmp.eq.s32.totalorder %s91, 0
      %s94 = sadd.s32 %s93, 1
      %s95 = scalar_select %p92, %s93, %s94
      %p98 = pneg %p92
      %p99 = scmp.eq.s32.totalorder %s15, 1
      %p100 = por %p98, %p99
      %p101 = scmp.ne.s32.totalorder %s93, %s96
      %p102 = scmp.eq.s32.totalorder %s15, 0
      %p103 = por %p101, %p102
      %p104 = scmp.ne.s32.totalorder %s93, %s96
      %p105 = scmp.eq.s32.totalorder %s20, 1
      %p106 = por %p104, %p105
      %p107 = scmp.ne.s32.totalorder %s96, %s97
      %p108 = scmp.eq.s32.totalorder %s20, 0
      %p109 = por %p107, %p108
      %p110 = scmp.ne.s32.totalorder %s96, %s97
      %p111 = scmp.eq.s32.totalorder %s21, 1
      %p112 = por %p110, %p111
      %p114 = scmp.ne.s32.totalorder %s97, %s113
      %p115 = scmp.eq.s32.totalorder %s21, 0
      %p116 = por %p114, %p115
      %p117 = scmp.le.s32.totalorder 1, %s15
      %p118 = scmp.lt.s32.totalorder %s15, 3
      %p119 = pnand %p117, %p118
      %p120 = pneg %p119
      // Predicated region
      $region9: #{tpu_custom_call.1} parent=5 // pred_check
        _
      $region10: #{tpu_custom_call.1} parent=5 // pred_check_branch
        %122 = sbr.rel (%p119) target = $region12
      $region11: #{tpu_custom_call.1} parent=5 // pred_region
        %s123 = ssub.s32 %s15, 1
        // Predicated region
        $region13: #{tpu_custom_call.1} parent=11 // pred_check
          %p124 = pneg %p62
        $region14: #{tpu_custom_call.1} parent=11 // pred_check_branch
          %126 = sbr.rel (%p124) target = $region16
        $region15: #{tpu_custom_call.1} parent=11 // pred_region
          _
        $region16: #{tpu_custom_call.1} parent=11 // pred_fallthru
          _
        // Predicated region
        $region17: #{tpu_custom_call.1} parent=11 // pred_check
          %p127 = pneg %p83
        $region18: #{tpu_custom_call.1} parent=11 // pred_check_branch
          %129 = sbr.rel (%p127) target = $region20
        $region19: #{tpu_custom_call.1} parent=11 // pred_region
          _
        $region20: #{tpu_custom_call.1} parent=11 // pred_fallthru
          _
      $region12: #{tpu_custom_call.1} parent=5 // pred_fallthru
        _
      %p130 = scmp.lt.s32.totalorder %s15, 2
      // Predicated region
      $region21: #{tpu_custom_call.1} parent=5 // pred_check
        %p131 = pneg %p130
      $region22: #{tpu_custom_call.1} parent=5 // pred_check_branch
        %133 = sbr.rel (%p131) target = $region24
      $region23: #{tpu_custom_call.1} parent=5 // pred_region
        // Predicated region
        $region25: #{tpu_custom_call.1} parent=23 // pred_check
          %p134 = pneg %p35
        $region26: #{tpu_custom_call.1} parent=23 // pred_check_branch
          %136 = sbr.rel (%p134) target = $region28
        $region27: #{tpu_custom_call.1} parent=23 // pred_region
          %s137 = sand.u32 %s25, 1
          %s138 = scalar_lea.sflag [#allocation4], %s137
          %s139 = sand.u32 %s25, 1
          %s140 = smul.addr %s139, 40
          %s141 = scalar_lea.vmem [#allocation3], %s140
          %s143 = ssub.s32 640, 640
          %144 = vsyncadd %s138, %s143
          %s145 = smul.addr %s15, 5
          %s146 = smul.addr %s145, 128
          %s147 = scalar_lea.hbm %s0, %s146
          %s149 = sshll.u32 %s141, 4
          %s150 = int_to_ptr.vmem [resolvable:$true] %s149
          %152 = dma.hbm_to_vmem [thread:$0]  %s147, 640, %s150, %s138
        $region28: #{tpu_custom_call.1} parent=23 // pred_fallthru
          _
      $region24: #{tpu_custom_call.1} parent=5 // pred_fallthru
        _
      %p153 = scmp.le.s32.totalorder 1, %s15
      %p154 = scmp.lt.s32.totalorder %s15, 3
      %p155 = pnand %p153, %p154
      %p156 = pneg %p155
      // Predicated region
      $region29: #{tpu_custom_call.1} parent=5 // pred_check
        _
      $region30: #{tpu_custom_call.1} parent=5 // pred_check_branch
        %158 = sbr.rel (%p155) target = $region32
      $region31: #{tpu_custom_call.1} parent=5 // pred_region
        %s159 = ssub.s32 %s15, 1
        %s160 = sand.u32 %s28, 1
        %s161 = scalar_lea.sflag [#allocation4], %s160
        %s162 = sand.u32 %s28, 1
        %s163 = smul.addr %s162, 40
        %s164 = scalar_lea.vmem [#allocation3], %s163
        // Predicated region
        $region33: #{tpu_custom_call.1} parent=31 // pred_check
          %p165 = pneg %p41
        $region34: #{tpu_custom_call.1} parent=31 // pred_check_branch
          %167 = sbr.rel (%p165) target = $region36
        $region35: #{tpu_custom_call.1} parent=31 // pred_region
          %168 = dma.done %s161, 640
        $region36: #{tpu_custom_call.1} parent=31 // pred_fallthru
          _
        %s169 = sand.u32 %s28, 1
        %s170 = scalar_lea.sflag [#allocation4], %s169
        %s171 = sand.u32 %s28, 1
        %s172 = smul.addr %s171, 40
        %s173 = scalar_lea.vmem [#allocation3], %s172
        %p174 = pneg %p41
        %p175 = pneg %p38
        %p176 = pneg %p62
        %p177 = pneg %p59
        %p178 = pneg %p83
        %p179 = pneg %p80
        %p180 = pneg %p109
        %p181 = pneg %p106
        %s182 = sand.u32 %s96, 1
        %s183 = scalar_lea.sflag [#allocation5], %s182
        %s184 = sand.u32 %s96, 1
        %s185 = smul.addr %s184, 32
        %s186 = scalar_lea.vmem [#allocation6], %s185
        %v187 = vld [vmem:[%s164] sm:$0xff]
        %v188 = vld [vmem:[%s164 + $0x8] sm:$0xff]
        %v189 = vld [vmem:[%s164 + $0x10] sm:$0xff]
        %v190 = vld [vmem:[%s164 + $0x18] sm:$0xff]
        %191 = vst [vmem:[#allocation2] sm:$0xff] %v187
        %192 = vst [vmem:[#allocation2 + $0x8] sm:$0xff] %v188
        %193 = vst [vmem:[#allocation2 + $0x10] sm:$0xff] %v189
        %194 = vst [vmem:[#allocation2 + $0x18] sm:$0xff] %v190
        %v195 = vld [vmem:[%s164] sm:$0xff]
        %v196 = vld [vmem:[%s164 + $0x8] sm:$0xff]
        %v197 = vld [vmem:[%s164 + $0x10] sm:$0xff]
        %v198 = vld [vmem:[%s164 + $0x18] sm:$0xff]
        %v199 = vld [vmem:[%s164 + $0x20] sm:$0xff]
        %205 = vrot.lane.b32.xlu0 %v195, 127
        %v206 = vpop.permute.xlu0 %205
        %207 = vrot.lane.b32.xlu0 %v196, 127
        %v208 = vpop.permute.xlu0 %207
        %209 = vrot.lane.b32.xlu0 %v197, 127
        %v210 = vpop.permute.xlu0 %209
        %211 = vrot.lane.b32.xlu0 %v198, 127
        %v212 = vpop.permute.xlu0 %211
        %213 = vrot.lane.b32.xlu0 %v199, 127
        %v214 = vpop.permute.xlu0 %213
        %vm215 = vcmask 1039360
        %v216 = vsel %vm215, %v206, %v208
        %v217 = vsel %vm215, %v208, %v210
        %v218 = vsel %vm215, %v210, %v212
        %v219 = vsel %vm215, %v212, %v214
        %224 = vst [vmem:[#allocation2 + $0x20] sm:$0xff] %v216
        %225 = vst [vmem:[#allocation2 + $0x28] sm:$0xff] %v217
        %226 = vst [vmem:[#allocation2 + $0x30] sm:$0xff] %v218
        %227 = vst [vmem:[#allocation2 + $0x38] sm:$0xff] %v219
        %v228 = vld [vmem:[%s164] sm:$0xff]
        %v229 = vld [vmem:[%s164 + $0x8] sm:$0xff]
        %v230 = vld [vmem:[%s164 + $0x10] sm:$0xff]
        %v231 = vld [vmem:[%s164 + $0x18] sm:$0xff]
        %v232 = vld [vmem:[%s164 + $0x20] sm:$0xff]
        %238 = vrot.lane.b32.xlu0 %v228, 126
        %v239 = vpop.permute.xlu0 %238
        %240 = vrot.lane.b32.xlu0 %v229, 126
        %v241 = vpop.permute.xlu0 %240
        %242 = vrot.lane.b32.xlu0 %v230, 126
        %v243 = vpop.permute.xlu0 %242
        %244 = vrot.lane.b32.xlu0 %v231, 126
        %v245 = vpop.permute.xlu0 %244
        %246 = vrot.lane.b32.xlu0 %v232, 126
        %v247 = vpop.permute.xlu0 %246
        %vm248 = vcmask 1031168
        %v249 = vsel %vm248, %v239, %v241
        %v250 = vsel %vm248, %v241, %v243
        %v251 = vsel %vm248, %v243, %v245
        %v252 = vsel %vm248, %v245, %v247
        %257 = vst [vmem:[#allocation2 + $0x40] sm:$0xff] %v249
        %258 = vst [vmem:[#allocation2 + $0x48] sm:$0xff] %v250
        %259 = vst [vmem:[#allocation2 + $0x50] sm:$0xff] %v251
        %260 = vst [vmem:[#allocation2 + $0x58] sm:$0xff] %v252
        %v261 = vld [vmem:[%s164] sm:$0xff]
        %v262 = vld [vmem:[%s164 + $0x8] sm:$0xff]
        %v263 = vld [vmem:[%s164 + $0x10] sm:$0xff]
        %v264 = vld [vmem:[%s164 + $0x18] sm:$0xff]
        %v265 = vld [vmem:[%s164 + $0x20] sm:$0xff]
        %271 = vrot.lane.b32.xlu0 %v261, 125
        %v272 = vpop.permute.xlu0 %271
        %273 = vrot.lane.b32.xlu0 %v262, 125
        %v274 = vpop.permute.xlu0 %273
        %275 = vrot.lane.b32.xlu0 %v263, 125
        %v276 = vpop.permute.xlu0 %275
        %277 = vrot.lane.b32.xlu0 %v264, 125
        %v278 = vpop.permute.xlu0 %277
        %279 = vrot.lane.b32.xlu0 %v265, 125
        %v280 = vpop.permute.xlu0 %279
        %vm281 = vcmask 1022976
        %v282 = vsel %vm281, %v272, %v274
        %v283 = vsel %vm281, %v274, %v276
        %v284 = vsel %vm281, %v276, %v278
        %v285 = vsel %vm281, %v278, %v280
        %290 = vst [vmem:[#allocation2 + $0x60] sm:$0xff] %v282
        %291 = vst [vmem:[#allocation2 + $0x68] sm:$0xff] %v283
        %292 = vst [vmem:[#allocation2 + $0x70] sm:$0xff] %v284
        %293 = vst [vmem:[#allocation2 + $0x78] sm:$0xff] %v285
        %v294 = vld [vmem:[%s164] sm:$0xff]
        %v295 = vld [vmem:[%s164 + $0x8] sm:$0xff]
        %v296 = vld [vmem:[%s164 + $0x10] sm:$0xff]
        %v297 = vld [vmem:[%s164 + $0x18] sm:$0xff]
        %v298 = vld [vmem:[%s164 + $0x20] sm:$0xff]
        %304 = vrot.lane.b32.xlu0 %v294, 106
        %v305 = vpop.permute.xlu0 %304
        %306 = vrot.lane.b32.xlu0 %v295, 106
        %v307 = vpop.permute.xlu0 %306
        %308 = vrot.lane.b32.xlu0 %v296, 106
        %v309 = vpop.permute.xlu0 %308
        %310 = vrot.lane.b32.xlu0 %v297, 106
        %v311 = vpop.permute.xlu0 %310
        %312 = vrot.lane.b32.xlu0 %v298, 106
        %v313 = vpop.permute.xlu0 %312
        %vm314 = vcmask 867328
        %v315 = vsel %vm314, %v305, %v307
        %v316 = vsel %vm314, %v307, %v309
        %v317 = vsel %vm314, %v309, %v311
        %v318 = vsel %vm314, %v311, %v313
        %323 = vst [vmem:[#allocation2 + $0x80] sm:$0xff] %v315
        %324 = vst [vmem:[#allocation2 + $0x88] sm:$0xff] %v316
        %325 = vst [vmem:[#allocation2 + $0x90] sm:$0xff] %v317
        %326 = vst [vmem:[#allocation2 + $0x98] sm:$0xff] %v318
        %v327 = vld [vmem:[%s164] sm:$0xff]
        %v328 = vld [vmem:[%s164 + $0x8] sm:$0xff]
        %v329 = vld [vmem:[%s164 + $0x10] sm:$0xff]
        %v330 = vld [vmem:[%s164 + $0x18] sm:$0xff]
        %v331 = vld [vmem:[%s164 + $0x20] sm:$0xff]
        %337 = vrot.lane.b32.xlu0 %v327, 105
        %v338 = vpop.permute.xlu0 %337
        %339 = vrot.lane.b32.xlu0 %v328, 105
        %v340 = vpop.permute.xlu0 %339
        %341 = vrot.lane.b32.xlu0 %v329, 105
        %v342 = vpop.permute.xlu0 %341
        %343 = vrot.lane.b32.xlu0 %v330, 105
        %v344 = vpop.permute.xlu0 %343
        %345 = vrot.lane.b32.xlu0 %v331, 105
        %v346 = vpop.permute.xlu0 %345
        %vm347 = vcmask 859136
        %v348 = vsel %vm347, %v338, %v340
        %v349 = vsel %vm347, %v340, %v342
        %v350 = vsel %vm347, %v342, %v344
        %v351 = vsel %vm347, %v344, %v346
        %356 = vst [vmem:[#allocation2 + $0xa0] sm:$0xff] %v348
        %357 = vst [vmem:[#allocation2 + $0xa8] sm:$0xff] %v349
        %358 = vst [vmem:[#allocation2 + $0xb0] sm:$0xff] %v350
        %359 = vst [vmem:[#allocation2 + $0xb8] sm:$0xff] %v351
        %v360 = vld [vmem:[%s164] sm:$0xff]
        %v361 = vld [vmem:[%s164 + $0x8] sm:$0xff]
        %v362 = vld [vmem:[%s164 + $0x10] sm:$0xff]
        %v363 = vld [vmem:[%s164 + $0x18] sm:$0xff]
        %v364 = vld [vmem:[%s164 + $0x20] sm:$0xff]
        %370 = vrot.lane.b32.xlu0 %v360, 104
        %v371 = vpop.permute.xlu0 %370
        %372 = vrot.lane.b32.xlu0 %v361, 104
        %v373 = vpop.permute.xlu0 %372
        %374 = vrot.lane.b32.xlu0 %v362, 104
        %v375 = vpop.permute.xlu0 %374
        %376 = vrot.lane.b32.xlu0 %v363, 104
        %v377 = vpop.permute.xlu0 %376
        %378 = vrot.lane.b32.xlu0 %v364, 104
        %v379 = vpop.permute.xlu0 %378
        %vm380 = vcmask 850944
        %v381 = vsel %vm380, %v371, %v373
        %v382 = vsel %vm380, %v373, %v375
        %v383 = vsel %vm380, %v375, %v377
        %v384 = vsel %vm380, %v377, %v379
        %389 = vst [vmem:[#allocation2 + $0xc0] sm:$0xff] %v381
        %390 = vst [vmem:[#allocation2 + $0xc8] sm:$0xff] %v382
        %391 = vst [vmem:[#allocation2 + $0xd0] sm:$0xff] %v383
        %392 = vst [vmem:[#allocation2 + $0xd8] sm:$0xff] %v384
        %v393 = vld [vmem:[%s164] sm:$0xff]
        %v394 = vld [vmem:[%s164 + $0x8] sm:$0xff]
        %v395 = vld [vmem:[%s164 + $0x10] sm:$0xff]
        %v396 = vld [vmem:[%s164 + $0x18] sm:$0xff]
        %v397 = vld [vmem:[%s164 + $0x20] sm:$0xff]
        %403 = vrot.lane.b32.xlu0 %v393, 103
        %v404 = vpop.permute.xlu0 %403
        %405 = vrot.lane.b32.xlu0 %v394, 103
        %v406 = vpop.permute.xlu0 %405
        %407 = vrot.lane.b32.xlu0 %v395, 103
        %v408 = vpop.permute.xlu0 %407
        %409 = vrot.lane.b32.xlu0 %v396, 103
        %v410 = vpop.permute.xlu0 %409
        %411 = vrot.lane.b32.xlu0 %v397, 103
        %v412 = vpop.permute.xlu0 %411
        %vm413 = vcmask 842752
        %v414 = vsel %vm413, %v404, %v406
        %v415 = vsel %vm413, %v406, %v408
        %v416 = vsel %vm413, %v408, %v410
        %v417 = vsel %vm413, %v410, %v412
        %422 = vst [vmem:[#allocation2 + $0xe0] sm:$0xff] %v414
        %423 = vst [vmem:[#allocation2 + $0xe8] sm:$0xff] %v415
        %424 = vst [vmem:[#allocation2 + $0xf0] sm:$0xff] %v416
        %425 = vst [vmem:[#allocation2 + $0xf8] sm:$0xff] %v417
        %v426 = vld [vmem:[%s164] sm:$0xff]
        %v427 = vld [vmem:[%s164 + $0x8] sm:$0xff]
        %v428 = vld [vmem:[%s164 + $0x10] sm:$0xff]
        %v429 = vld [vmem:[%s164 + $0x18] sm:$0xff]
        %v430 = vld [vmem:[%s164 + $0x20] sm:$0xff]
        %436 = vrot.lane.b32.xlu0 %v426, 84
        %v437 = vpop.permute.xlu0 %436
        %438 = vrot.lane.b32.xlu0 %v427, 84
        %v439 = vpop.permute.xlu0 %438
        %440 = vrot.lane.b32.xlu0 %v428, 84
        %v441 = vpop.permute.xlu0 %440
        %442 = vrot.lane.b32.xlu0 %v429, 84
        %v443 = vpop.permute.xlu0 %442
        %444 = vrot.lane.b32.xlu0 %v430, 84
        %v445 = vpop.permute.xlu0 %444
        %vm446 = vcmask 687104
        %v447 = vsel %vm446, %v437, %v439
        %v448 = vsel %vm446, %v439, %v441
        %v449 = vsel %vm446, %v441, %v443
        %v450 = vsel %vm446, %v443, %v445
        %455 = vst [vmem:[#allocation2 + $0x100] sm:$0xff] %v447
        %456 = vst [vmem:[#allocation2 + $0x108] sm:$0xff] %v448
        %457 = vst [vmem:[#allocation2 + $0x110] sm:$0xff] %v449
        %458 = vst [vmem:[#allocation2 + $0x118] sm:$0xff] %v450
        %v459 = vld [vmem:[%s164] sm:$0xff]
        %v460 = vld [vmem:[%s164 + $0x8] sm:$0xff]
        %v461 = vld [vmem:[%s164 + $0x10] sm:$0xff]
        %v462 = vld [vmem:[%s164 + $0x18] sm:$0xff]
        %v463 = vld [vmem:[%s164 + $0x20] sm:$0xff]
        %469 = vrot.lane.b32.xlu0 %v459, 83
        %v470 = vpop.permute.xlu0 %469
        %471 = vrot.lane.b32.xlu0 %v460, 83
        %v472 = vpop.permute.xlu0 %471
        %473 = vrot.lane.b32.xlu0 %v461, 83
        %v474 = vpop.permute.xlu0 %473
        %475 = vrot.lane.b32.xlu0 %v462, 83
        %v476 = vpop.permute.xlu0 %475
        %477 = vrot.lane.b32.xlu0 %v463, 83
        %v478 = vpop.permute.xlu0 %477
        %vm479 = vcmask 678912
        %v480 = vsel %vm479, %v470, %v472
        %v481 = vsel %vm479, %v472, %v474
        %v482 = vsel %vm479, %v474, %v476
        %v483 = vsel %vm479, %v476, %v478
        %488 = vst [vmem:[#allocation2 + $0x120] sm:$0xff] %v480
        %489 = vst [vmem:[#allocation2 + $0x128] sm:$0xff] %v481
        %490 = vst [vmem:[#allocation2 + $0x130] sm:$0xff] %v482
        %491 = vst [vmem:[#allocation2 + $0x138] sm:$0xff] %v483
        %v492 = vld [vmem:[%s164] sm:$0xff]
        %v493 = vld [vmem:[%s164 + $0x8] sm:$0xff]
        %v494 = vld [vmem:[%s164 + $0x10] sm:$0xff]
        %v495 = vld [vmem:[%s164 + $0x18] sm:$0xff]
        %v496 = vld [vmem:[%s164 + $0x20] sm:$0xff]
        %502 = vrot.lane.b32.xlu0 %v492, 82
        %v503 = vpop.permute.xlu0 %502
        %504 = vrot.lane.b32.xlu0 %v493, 82
        %v505 = vpop.permute.xlu0 %504
        %506 = vrot.lane.b32.xlu0 %v494, 82
        %v507 = vpop.permute.xlu0 %506
        %508 = vrot.lane.b32.xlu0 %v495, 82
        %v509 = vpop.permute.xlu0 %508
        %510 = vrot.lane.b32.xlu0 %v496, 82
        %v511 = vpop.permute.xlu0 %510
        %vm512 = vcmask 670720
        %v513 = vsel %vm512, %v503, %v505
        %v514 = vsel %vm512, %v505, %v507
        %v515 = vsel %vm512, %v507, %v509
        %v516 = vsel %vm512, %v509, %v511
        %521 = vst [vmem:[#allocation2 + $0x140] sm:$0xff] %v513
        %522 = vst [vmem:[#allocation2 + $0x148] sm:$0xff] %v514
        %523 = vst [vmem:[#allocation2 + $0x150] sm:$0xff] %v515
        %524 = vst [vmem:[#allocation2 + $0x158] sm:$0xff] %v516
        %v525 = vld [vmem:[%s164] sm:$0xff]
        %v526 = vld [vmem:[%s164 + $0x8] sm:$0xff]
        %v527 = vld [vmem:[%s164 + $0x10] sm:$0xff]
        %v528 = vld [vmem:[%s164 + $0x18] sm:$0xff]
        %v529 = vld [vmem:[%s164 + $0x20] sm:$0xff]
        %535 = vrot.lane.b32.xlu0 %v525, 81
        %v536 = vpop.permute.xlu0 %535
        %537 = vrot.lane.b32.xlu0 %v526, 81
        %v538 = vpop.permute.xlu0 %537
        %539 = vrot.lane.b32.xlu0 %v527, 81
        %v540 = vpop.permute.xlu0 %539
        %541 = vrot.lane.b32.xlu0 %v528, 81
        %v542 = vpop.permute.xlu0 %541
        %543 = vrot.lane.b32.xlu0 %v529, 81
        %v544 = vpop.permute.xlu0 %543
        %vm545 = vcmask 662528
        %v546 = vsel %vm545, %v536, %v538
        %v547 = vsel %vm545, %v538, %v540
        %v548 = vsel %vm545, %v540, %v542
        %v549 = vsel %vm545, %v542, %v544
        %554 = vst [vmem:[#allocation2 + $0x160] sm:$0xff] %v546
        %555 = vst [vmem:[#allocation2 + $0x168] sm:$0xff] %v547
        %556 = vst [vmem:[#allocation2 + $0x170] sm:$0xff] %v548
        %557 = vst [vmem:[#allocation2 + $0x178] sm:$0xff] %v549
        %v558 = vld [vmem:[%s164] sm:$0xff]
        %v559 = vld [vmem:[%s164 + $0x8] sm:$0xff]
        %v560 = vld [vmem:[%s164 + $0x10] sm:$0xff]
        %v561 = vld [vmem:[%s164 + $0x18] sm:$0xff]
        %v562 = vld [vmem:[%s164 + $0x20] sm:$0xff]
        %568 = vrot.lane.b32.xlu0 %v558, 62
        %v569 = vpop.permute.xlu0 %568
        %570 = vrot.lane.b32.xlu0 %v559, 62
        %v571 = vpop.permute.xlu0 %570
        %572 = vrot.lane.b32.xlu0 %v560, 62
        %v573 = vpop.permute.xlu0 %572
        %574 = vrot.lane.b32.xlu0 %v561, 62
        %v575 = vpop.permute.xlu0 %574
        %576 = vrot.lane.b32.xlu0 %v562, 62
        %v577 = vpop.permute.xlu0 %576
        %vm578 = vcmask 506880
        %v579 = vsel %vm578, %v569, %v571
        %v580 = vsel %vm578, %v571, %v573
        %v581 = vsel %vm578, %v573, %v575
        %v582 = vsel %vm578, %v575, %v577
        %587 = vst [vmem:[#allocation2 + $0x180] sm:$0xff] %v579
        %588 = vst [vmem:[#allocation2 + $0x188] sm:$0xff] %v580
        %589 = vst [vmem:[#allocation2 + $0x190] sm:$0xff] %v581
        %590 = vst [vmem:[#allocation2 + $0x198] sm:$0xff] %v582
        %v591 = vld [vmem:[%s164] sm:$0xff]
        %v592 = vld [vmem:[%s164 + $0x8] sm:$0xff]
        %v593 = vld [vmem:[%s164 + $0x10] sm:$0xff]
        %v594 = vld [vmem:[%s164 + $0x18] sm:$0xff]
        %v595 = vld [vmem:[%s164 + $0x20] sm:$0xff]
        %601 = vrot.lane.b32.xlu0 %v591, 61
        %v602 = vpop.permute.xlu0 %601
        %603 = vrot.lane.b32.xlu0 %v592, 61
        %v604 = vpop.permute.xlu0 %603
        %605 = vrot.lane.b32.xlu0 %v593, 61
        %v606 = vpop.permute.xlu0 %605
        %607 = vrot.lane.b32.xlu0 %v594, 61
        %v608 = vpop.permute.xlu0 %607
        %609 = vrot.lane.b32.xlu0 %v595, 61
        %v610 = vpop.permute.xlu0 %609
        %vm611 = vcmask 498688
        %v612 = vsel %vm611, %v602, %v604
        %v613 = vsel %vm611, %v604, %v606
        %v614 = vsel %vm611, %v606, %v608
        %v615 = vsel %vm611, %v608, %v610
        %620 = vst [vmem:[#allocation2 + $0x1a0] sm:$0xff] %v612
        %621 = vst [vmem:[#allocation2 + $0x1a8] sm:$0xff] %v613
        %622 = vst [vmem:[#allocation2 + $0x1b0] sm:$0xff] %v614
        %623 = vst [vmem:[#allocation2 + $0x1b8] sm:$0xff] %v615
        %v624 = vld [vmem:[%s164] sm:$0xff]
        %v625 = vld [vmem:[%s164 + $0x8] sm:$0xff]
        %v626 = vld [vmem:[%s164 + $0x10] sm:$0xff]
        %v627 = vld [vmem:[%s164 + $0x18] sm:$0xff]
        %v628 = vld [vmem:[%s164 + $0x20] sm:$0xff]
        %634 = vrot.lane.b32.xlu0 %v624, 60
        %v635 = vpop.permute.xlu0 %634
        %636 = vrot.lane.b32.xlu0 %v625, 60
        %v637 = vpop.permute.xlu0 %636
        %638 = vrot.lane.b32.xlu0 %v626, 60
        %v639 = vpop.permute.xlu0 %638
        %640 = vrot.lane.b32.xlu0 %v627, 60
        %v641 = vpop.permute.xlu0 %640
        %642 = vrot.lane.b32.xlu0 %v628, 60
        %v643 = vpop.permute.xlu0 %642
        %vm644 = vcmask 490496
        %v645 = vsel %vm644, %v635, %v637
        %v646 = vsel %vm644, %v637, %v639
        %v647 = vsel %vm644, %v639, %v641
        %v648 = vsel %vm644, %v641, %v643
        %653 = vst [vmem:[#allocation2 + $0x1c0] sm:$0xff] %v645
        %654 = vst [vmem:[#allocation2 + $0x1c8] sm:$0xff] %v646
        %655 = vst [vmem:[#allocation2 + $0x1d0] sm:$0xff] %v647
        %656 = vst [vmem:[#allocation2 + $0x1d8] sm:$0xff] %v648
        %v657 = vld [vmem:[%s164] sm:$0xff]
        %v658 = vld [vmem:[%s164 + $0x8] sm:$0xff]
        %v659 = vld [vmem:[%s164 + $0x10] sm:$0xff]
        %v660 = vld [vmem:[%s164 + $0x18] sm:$0xff]
        %v661 = vld [vmem:[%s164 + $0x20] sm:$0xff]
        %667 = vrot.lane.b32.xlu0 %v657, 59
        %v668 = vpop.permute.xlu0 %667
        %669 = vrot.lane.b32.xlu0 %v658, 59
        %v670 = vpop.permute.xlu0 %669
        %671 = vrot.lane.b32.xlu0 %v659, 59
        %v672 = vpop.permute.xlu0 %671
        %673 = vrot.lane.b32.xlu0 %v660, 59
        %v674 = vpop.permute.xlu0 %673
        %675 = vrot.lane.b32.xlu0 %v661, 59
        %v676 = vpop.permute.xlu0 %675
        %vm677 = vcmask 482304
        %v678 = vsel %vm677, %v668, %v670
        %v679 = vsel %vm677, %v670, %v672
        %v680 = vsel %vm677, %v672, %v674
        %v681 = vsel %vm677, %v674, %v676
        %686 = vst [vmem:[#allocation2 + $0x1e0] sm:$0xff] %v678
        %687 = vst [vmem:[#allocation2 + $0x1e8] sm:$0xff] %v679
        %688 = vst [vmem:[#allocation2 + $0x1f0] sm:$0xff] %v680
        %689 = vst [vmem:[#allocation2 + $0x1f8] sm:$0xff] %v681
        %v690 = vld [vmem:[%s1] sm:$0xff]
        %v691 = vld [vmem:[#allocation2] sm:$0xff]
        %v692 = vld [vmem:[#allocation2 + $0x8] sm:$0xff]
        %v693 = vld [vmem:[#allocation2 + $0x10] sm:$0xff]
        %v694 = vld [vmem:[#allocation2 + $0x18] sm:$0xff]
        %v695 = vld [vmem:[#allocation2 + $0x20] sm:$0xff]
        %v696 = vld [vmem:[#allocation2 + $0x28] sm:$0xff]
        %v697 = vld [vmem:[#allocation2 + $0x30] sm:$0xff]
        %v698 = vld [vmem:[#allocation2 + $0x38] sm:$0xff]
        %v699 = vld [vmem:[#allocation2 + $0x40] sm:$0xff]
        %v700 = vld [vmem:[#allocation2 + $0x48] sm:$0xff]
        %v701 = vld [vmem:[#allocation2 + $0x50] sm:$0xff]
        %v702 = vld [vmem:[#allocation2 + $0x58] sm:$0xff]
        %v703 = vld [vmem:[#allocation2 + $0x60] sm:$0xff]
        %v704 = vld [vmem:[#allocation2 + $0x68] sm:$0xff]
        %v705 = vld [vmem:[#allocation2 + $0x70] sm:$0xff]
        %v706 = vld [vmem:[#allocation2 + $0x78] sm:$0xff]
        %v707 = vld [vmem:[#allocation2 + $0x80] sm:$0xff]
        %v708 = vld [vmem:[#allocation2 + $0x88] sm:$0xff]
        %v709 = vld [vmem:[#allocation2 + $0x90] sm:$0xff]
        %v710 = vld [vmem:[#allocation2 + $0x98] sm:$0xff]
        %v711 = vld [vmem:[#allocation2 + $0xa0] sm:$0xff]
        %v712 = vld [vmem:[#allocation2 + $0xa8] sm:$0xff]
        %v713 = vld [vmem:[#allocation2 + $0xb0] sm:$0xff]
        %v714 = vld [vmem:[#allocation2 + $0xb8] sm:$0xff]
        %v715 = vld [vmem:[#allocation2 + $0xc0] sm:$0xff]
        %v716 = vld [vmem:[#allocation2 + $0xc8] sm:$0xff]
        %v717 = vld [vmem:[#allocation2 + $0xd0] sm:$0xff]
        %v718 = vld [vmem:[#allocation2 + $0xd8] sm:$0xff]
        %v719 = vld [vmem:[#allocation2 + $0xe0] sm:$0xff]
        %v720 = vld [vmem:[#allocation2 + $0xe8] sm:$0xff]
        %v721 = vld [vmem:[#allocation2 + $0xf0] sm:$0xff]
        %v722 = vld [vmem:[#allocation2 + $0xf8] sm:$0xff]
        %v723 = vld [vmem:[#allocation2 + $0x100] sm:$0xff]
        %v724 = vld [vmem:[#allocation2 + $0x108] sm:$0xff]
        %v725 = vld [vmem:[#allocation2 + $0x110] sm:$0xff]
        %v726 = vld [vmem:[#allocation2 + $0x118] sm:$0xff]
        %v727 = vld [vmem:[#allocation2 + $0x120] sm:$0xff]
        %v728 = vld [vmem:[#allocation2 + $0x128] sm:$0xff]
        %v729 = vld [vmem:[#allocation2 + $0x130] sm:$0xff]
        %v730 = vld [vmem:[#allocation2 + $0x138] sm:$0xff]
        %v731 = vld [vmem:[#allocation2 + $0x140] sm:$0xff]
        %v732 = vld [vmem:[#allocation2 + $0x148] sm:$0xff]
        %v733 = vld [vmem:[#allocation2 + $0x150] sm:$0xff]
        %v734 = vld [vmem:[#allocation2 + $0x158] sm:$0xff]
        %v735 = vld [vmem:[#allocation2 + $0x160] sm:$0xff]
        %v736 = vld [vmem:[#allocation2 + $0x168] sm:$0xff]
        %v737 = vld [vmem:[#allocation2 + $0x170] sm:$0xff]
        %v738 = vld [vmem:[#allocation2 + $0x178] sm:$0xff]
        %v739 = vld [vmem:[#allocation2 + $0x180] sm:$0xff]
        %v740 = vld [vmem:[#allocation2 + $0x188] sm:$0xff]
        %v741 = vld [vmem:[#allocation2 + $0x190] sm:$0xff]
        %v742 = vld [vmem:[#allocation2 + $0x198] sm:$0xff]
        %v743 = vld [vmem:[#allocation2 + $0x1a0] sm:$0xff]
        %v744 = vld [vmem:[#allocation2 + $0x1a8] sm:$0xff]
        %v745 = vld [vmem:[#allocation2 + $0x1b0] sm:$0xff]
        %v746 = vld [vmem:[#allocation2 + $0x1b8] sm:$0xff]
        %v747 = vld [vmem:[#allocation2 + $0x1c0] sm:$0xff]
        %v748 = vld [vmem:[#allocation2 + $0x1c8] sm:$0xff]
        %v749 = vld [vmem:[#allocation2 + $0x1d0] sm:$0xff]
        %v750 = vld [vmem:[#allocation2 + $0x1d8] sm:$0xff]
        %v751 = vld [vmem:[#allocation2 + $0x1e0] sm:$0xff]
        %v752 = vld [vmem:[#allocation2 + $0x1e8] sm:$0xff]
        %v753 = vld [vmem:[#allocation2 + $0x1f0] sm:$0xff]
        %v754 = vld [vmem:[#allocation2 + $0x1f8] sm:$0xff]
        %v755 = vld [vmem:[%s2] sm:$0xff]
        %757 = vset.pattern.permute.xlu0 0
        %758 = vperm.xlu0 %757, %v755
        %v759 = vpop.permute.xlu0 %758
        %761 = vmatprep.subr.mxu0 %v692
        %762 = vmatpush1.msra.mxu0 %v691
        %763 = vmatprep.subr.mxu0 %v696
        %764 = vmatpush1.msra.mxu0 %v695
        %765 = vmatprep.subr.mxu0 %v700
        %766 = vmatpush1.msra.mxu0 %v699
        %767 = vmatprep.subr.mxu0 %v704
        %768 = vmatpush1.msra.mxu0 %v703
        %769 = vmatprep.subr.mxu0 %v708
        %770 = vmatpush1.msra.mxu0 %v707
        %771 = vmatprep.subr.mxu0 %v712
        %772 = vmatpush1.msra.mxu0 %v711
        %773 = vmatprep.subr.mxu0 %v716
        %774 = vmatpush1.msra.mxu0 %v715
        %775 = vmatprep.subr.mxu0 %v720
        %776 = vmatpush1.msra.mxu0 %v719
        %777 = vmatprep.subr.mxu0 %v724
        %778 = vmatpush1.msra.mxu0 %v723
        %779 = vmatprep.subr.mxu0 %v728
        %780 = vmatpush1.msra.mxu0 %v727
        %781 = vmatprep.subr.mxu0 %v732
        %782 = vmatpush1.msra.mxu0 %v731
        %783 = vmatprep.subr.mxu0 %v736
        %784 = vmatpush1.msra.mxu0 %v735
        %785 = vmatprep.subr.mxu0 %v740
        %786 = vmatpush1.msra.mxu0 %v739
        %787 = vmatprep.subr.mxu0 %v744
        %788 = vmatpush1.msra.mxu0 %v743
        %789 = vmatprep.subr.mxu0 %v748
        %790 = vmatpush1.msra.mxu0 %v747
        %791 = vmatprep.subr.mxu0 %v752
        %792 = vmatpush1.msra.mxu0 %v751
        %793 = vmatprep.subr.mxu0 0.0
        %794 = vmatpush1.msra.mxu0 0.0
        %795 = vmatprep.subr.mxu0 0.0
        %796 = vmatpush1.msra.mxu0 0.0
        %797 = vmatprep.subr.mxu0 0.0
        %798 = vmatpush1.msra.mxu0 0.0
        %799 = vmatprep.subr.mxu0 0.0
        %800 = vmatpush1.msra.mxu0 0.0
        %801 = vmatprep.subr.mxu0 0.0
        %802 = vmatpush1.msra.mxu0 0.0
        %803 = vmatprep.subr.mxu0 0.0
        %804 = vmatpush1.msra.mxu0 0.0
        %805 = vmatprep.subr.mxu0 0.0
        %806 = vmatpush1.msra.mxu0 0.0
        %807 = vmatprep.subr.mxu0 0.0
        %808 = vmatpush1.msra.mxu0 0.0
        %809 = vmatprep.subr.mxu0 0.0
        %810 = vmatpush1.msra.mxu0 0.0
        %811 = vmatprep.subr.mxu0 0.0
        %812 = vmatpush1.msra.mxu0 0.0
        %813 = vmatprep.subr.mxu0 0.0
        %814 = vmatpush1.msra.mxu0 0.0
        %815 = vmatprep.subr.mxu0 0.0
        %816 = vmatpush1.msra.mxu0 0.0
        %817 = vmatprep.subr.mxu0 0.0
        %818 = vmatpush1.msra.mxu0 0.0
        %819 = vmatprep.subr.mxu0 0.0
        %820 = vmatpush1.msra.mxu0 0.0
        %821 = vmatprep.subr.mxu0 0.0
        %822 = vmatpush1.msra.mxu0 0.0
        %823 = vmatprep.subr.mxu0 0.0
        %824 = vmatpush1.msra.mxu0 0.0
        %825 = vmatprep.mubr.f32.mxu0 0.0
        %826 = vmatmul.mubr.f32.gmra.mrb[0].mxu0 %v690
        %v827 = vpop.f32.mrb[0].mxu0
        %v828 = vadd.f32 %v759, %v827
        %v829 = vpop.f32.mrb[0].mxu0
        %v830 = vadd.f32 %v759, %v829
        %831 = vdwg.mxu0
        %832 = vmatprep.subr.mxu0 %v694
        %833 = vmatpush1.msra.mxu0 %v693
        %834 = vmatprep.subr.mxu0 %v698
        %835 = vmatpush1.msra.mxu0 %v697
        %836 = vmatprep.subr.mxu0 %v702
        %837 = vmatpush1.msra.mxu0 %v701
        %838 = vmatprep.subr.mxu0 %v706
        %839 = vmatpush1.msra.mxu0 %v705
        %840 = vmatprep.subr.mxu0 %v710
        %841 = vmatpush1.msra.mxu0 %v709
        %842 = vmatprep.subr.mxu0 %v714
        %843 = vmatpush1.msra.mxu0 %v713
        %844 = vmatprep.subr.mxu0 %v718
        %845 = vmatpush1.msra.mxu0 %v717
        %846 = vmatprep.subr.mxu0 %v722
        %847 = vmatpush1.msra.mxu0 %v721
        %848 = vmatprep.subr.mxu0 %v726
        %849 = vmatpush1.msra.mxu0 %v725
        %850 = vmatprep.subr.mxu0 %v730
        %851 = vmatpush1.msra.mxu0 %v729
        %852 = vmatprep.subr.mxu0 %v734
        %853 = vmatpush1.msra.mxu0 %v733
        %854 = vmatprep.subr.mxu0 %v738
        %855 = vmatpush1.msra.mxu0 %v737
        %856 = vmatprep.subr.mxu0 %v742
        %857 = vmatpush1.msra.mxu0 %v741
        %858 = vmatprep.subr.mxu0 %v746
        %859 = vmatpush1.msra.mxu0 %v745
        %860 = vmatprep.subr.mxu0 %v750
        %861 = vmatpush1.msra.mxu0 %v749
        %862 = vmatprep.subr.mxu0 %v754
        %863 = vmatpush1.msra.mxu0 %v753
        %864 = vmatprep.subr.mxu0 0.0
        %865 = vmatpush1.msra.mxu0 0.0
        %866 = vmatprep.subr.mxu0 0.0
        %867 = vmatpush1.msra.mxu0 0.0
        %868 = vmatprep.subr.mxu0 0.0
        %869 = vmatpush1.msra.mxu0 0.0
        %870 = vmatprep.subr.mxu0 0.0
        %871 = vmatpush1.msra.mxu0 0.0
        %872 = vmatprep.subr.mxu0 0.0
        %873 = vmatpush1.msra.mxu0 0.0
        %874 = vmatprep.subr.mxu0 0.0
        %875 = vmatpush1.msra.mxu0 0.0
        %876 = vmatprep.subr.mxu0 0.0
        %877 = vmatpush1.msra.mxu0 0.0
        %878 = vmatprep.subr.mxu0 0.0
        %879 = vmatpush1.msra.mxu0 0.0
        %880 = vmatprep.subr.mxu0 0.0
        %881 = vmatpush1.msra.mxu0 0.0
        %882 = vmatprep.subr.mxu0 0.0
        %883 = vmatpush1.msra.mxu0 0.0
        %884 = vmatprep.subr.mxu0 0.0
        %885 = vmatpush1.msra.mxu0 0.0
        %886 = vmatprep.subr.mxu0 0.0
        %887 = vmatpush1.msra.mxu0 0.0
        %888 = vmatprep.subr.mxu0 0.0
        %889 = vmatpush1.msra.mxu0 0.0
        %890 = vmatprep.subr.mxu0 0.0
        %891 = vmatpush1.msra.mxu0 0.0
        %892 = vmatprep.subr.mxu0 0.0
        %893 = vmatpush1.msra.mxu0 0.0
        %894 = vmatprep.subr.mxu0 0.0
        %895 = vmatpush1.msra.mxu0 0.0
        %896 = vmatprep.mubr.f32.mxu0 0.0
        %897 = vmatmul.mubr.f32.gmra.mrb[0].mxu0 %v690
        %v898 = vpop.f32.mrb[0].mxu0
        %v899 = vadd.f32 %v759, %v898
        %v900 = vpop.f32.mrb[0].mxu0
        %v901 = vadd.f32 %v759, %v900
        %902 = vdwg.mxu0
        %v903 = vsub.f32 0.0, %v828
        %v904 = vsub.f32 0.0, %v830
        %v905 = vsub.f32 0.0, %v899
        %v906 = vsub.f32 0.0, %v901
        %v907 = vmul.f32 %v903, 1.442695
        %v908 = vpow.pop %v907
        %v909 = vmul.f32 %v904, 1.442695
        %v910 = vpow.pop %v909
        %v911 = vmul.f32 %v905, 1.442695
        %v912 = vpow.pop %v911
        %v913 = vmul.f32 %v906, 1.442695
        %v914 = vpow.pop %v913
        %v915 = vadd.f32 %v908, 1.0
        %v916 = vadd.f32 %v910, 1.0
        %v917 = vadd.f32 %v912, 1.0
        %v918 = vadd.f32 %v914, 1.0
        %v919 = vrcp.pop %v915
        %v920 = vmul.f32 1.0, %v919
        %v921 = vrcp.pop %v916
        %v922 = vmul.f32 1.0, %v921
        %v923 = vrcp.pop %v917
        %v924 = vmul.f32 1.0, %v923
        %v925 = vrcp.pop %v918
        %v926 = vmul.f32 1.0, %v925
        %v927 = vmul.f32 %v828, %v920
        %v928 = vmul.f32 %v830, %v922
        %v929 = vmul.f32 %v899, %v924
        %v930 = vmul.f32 %v901, %v926
        %931 = vst [vmem:[%s186] sm:$0xff] %v927
        %932 = vst [vmem:[%s186 + $0x8] sm:$0xff] %v928
        %933 = vst [vmem:[%s186 + $0x10] sm:$0xff] %v929
        %934 = vst [vmem:[%s186 + $0x18] sm:$0xff] %v930
        %s935 = sand.u32 %s96, 1
        %s936 = scalar_lea.sflag [#allocation5], %s935
        %s937 = sand.u32 %s96, 1
        %s938 = smul.addr %s937, 32
        %s939 = scalar_lea.vmem [#allocation6], %s938
        // Predicated region
        $region37: #{tpu_custom_call.1} parent=31 // pred_check
          %p940 = pneg %p106
        $region38: #{tpu_custom_call.1} parent=31 // pred_check_branch
          %942 = sbr.rel (%p940) target = $region40
        $region39: #{tpu_custom_call.1} parent=31 // pred_region
          %s944 = ssub.s32 512, 512
          %945 = vsyncadd %s936, %s944
          %s946 = smul.addr %s20, 4
          %s947 = smul.addr %s946, 128
          %s948 = scalar_lea.hbm %s3, %s947
          %s950 = sshll.u32 %s939, 4
          %s951 = int_to_ptr.vmem [resolvable:$true] %s950
          %953 = dma.vmem_to_hbm [thread:$0]  %s951, 512, %s948, %s936
        $region40: #{tpu_custom_call.1} parent=31 // pred_fallthru
          _
      $region32: #{tpu_custom_call.1} parent=5 // pred_fallthru
        _
      %p954 = scmp.le.s32.totalorder 2, %s15
      // Predicated region
      $region41: #{tpu_custom_call.1} parent=5 // pred_check
        %p955 = pneg %p954
      $region42: #{tpu_custom_call.1} parent=5 // pred_check_branch
        %957 = sbr.rel (%p955) target = $region44
      $region43: #{tpu_custom_call.1} parent=5 // pred_region
        %s958 = ssub.s32 %s15, 2
        // Predicated region
        $region45: #{tpu_custom_call.1} parent=43 // pred_check
          %p959 = pneg %p112
        $region46: #{tpu_custom_call.1} parent=43 // pred_check_branch
          %961 = sbr.rel (%p959) target = $region48
        $region47: #{tpu_custom_call.1} parent=43 // pred_region
          %s962 = sand.u32 %s97, 1
          %s963 = scalar_lea.sflag [#allocation5], %s962
          %s964 = sand.u32 %s97, 1
          %s965 = smul.addr %s964, 32
          %s966 = scalar_lea.vmem [#allocation6], %s965
          %967 = dma.done %s963, 512
        $region48: #{tpu_custom_call.1} parent=43 // pred_fallthru
          _
      $region44: #{tpu_custom_call.1} parent=5 // pred_fallthru
        _
    $region6: #{tpu_custom_call.1} parent=1 // loop_footer
      %s19 = sadd.s32 1, %s15
    $region7: #{tpu_custom_call.1} parent=1 // loop_footer_branch
      %14 = sbr.rel target = $region3
    $region8: #{tpu_custom_call.1} parent=1 // loop_exit
      _
    %968 = vsyncpa [#allocation4], 1
    %s969 = scalar_lea.sflag [#allocation4], 1
    %970 = vsyncpa %s969, 1
    %971 = vsyncpa [#allocation5], 1
    %s972 = scalar_lea.sflag [#allocation5], 1
    %973 = vsyncpa %s972, 1

</llo_original>
